<compile_context>
chip_gen: v5e
topology: v5e:2x2
jax: 0.10.0
libtpu: 0.0.40
codegen_flags: <defaults>
</compile_context>

<pallas_src>
import numpy as np
import jax
import jax.numpy as jnp
from jax.experimental import pallas as pl
from jax.experimental.pallas import tpu as pltpu


# ---------------------------------------------------------------------------
# Fused Pallas kernel: the entire encoder forward in one launch.
# ---------------------------------------------------------------------------
def encoder_fused_kernel(x_ref,
                         m1_ref, b1_ref,
                         m2_ref, b2_ref,
                         m3_ref, b3_ref,
                         m4_ref, b4_ref,
                         m5_ref,
                         o_ref):
    """x: (B, T*D).  m_l: folded (pool_{l-1} @ conv_l) matrix with the
    eval-mode BN scale already folded into its columns.  b_l: per-channel
    folded bias (BN shift + conv bias) tiled over that layer's spatial
    positions, shape (1, H_l*W_l*C_l).  m5: pool_4 composed with the global
    mean (AdaptiveAvgPool2d(1) + flatten).  o: (B, dim)."""
    z = x_ref[...]
    for m_ref, b_ref in ((m1_ref, b1_ref),
                         (m2_ref, b2_ref),
                         (m3_ref, b3_ref),
                         (m4_ref, b4_ref)):
        y = jnp.dot(z, m_ref[...], preferred_element_type=jnp.float32)   # MXU
        z = jnp.maximum(y + b_ref[...], 0.0)        # bias (BN+conv) + ReLU (VPU)
    # Layer-4 AvgPool + AdaptiveAvgPool2d(1) + flatten, folded into one GEMM.
    o_ref[...] = jnp.dot(z, m5_ref[...], preferred_element_type=jnp.float32)


_VMEM = pl.BlockSpec(memory_space=pltpu.MemorySpace.VMEM)


def encoder_forward(x, folded):
    """x: (B, T, D) float32 -> (B, dim) float32.  Single pallas_call."""
    B = x.shape[0]
    dim = folded[-1].shape[-1]
    x_flat = x.reshape(B, -1)            # (B, T*D*Cin) with Cin=1, channels-last
    return pl.pallas_call(
        encoder_fused_kernel,
        out_shape=jax.ShapeDtypeStruct((B, dim), jnp.float32),
        in_specs=[_VMEM] * (1 + len(folded)),
        out_specs=_VMEM,
    )(x_flat, *folded)


# ---------------------------------------------------------------------------
# Weight-only folding helpers (host-side, run once at parameter build time).
# Flattening convention everywhere: index = (h*W + w)*C + c  (channels-last),
# row-vector convention: out = in @ M.
# ---------------------------------------------------------------------------
def _conv_as_matrix(w_hwcio, H, W, stride=2, pad=1):
    """Conv2d(3x3, stride, pad) as a dense (H*W*Cin, Ho*Wo*Cout) matrix.
    w_hwcio: numpy (3, 3, Cin, Cout)."""
    kh_, kw_, cin, cout = w_hwcio.shape
    Ho = (H + 2 * pad - kh_) // stride + 1
    Wo = (W + 2 * pad - kw_) // stride + 1
    M = np.zeros((H * W * cin, Ho * Wo * cout), np.float32)
    for i in range(Ho):
        for j in range(Wo):
            o = (i * Wo + j) * cout
            for kh in range(kh_):
                for kw in range(kw_):
                    h = i * stride + kh - pad
                    w_ = j * stride + kw - pad
                    if 0 <= h < H and 0 <= w_ < W:       # zero padding otherwise
                        inb = (h * W + w_) * cin
                        M[inb:inb + cin, o:o + cout] += w_hwcio[kh, kw]
    return M, Ho, Wo


def _avgpool3x3_as_matrix(H, W, C):
    """AvgPool2d(3, stride=1, padding=1), count_include_pad=True (always /9),
    as a dense (H*W*C, H*W*C) matrix (channel-diagonal)."""
    P = np.zeros((H * W * C, H * W * C), np.float32)
    cidx = np.arange(C)
    for i in range(H):
        for j in range(W):
            o = (i * W + j) * C
            for di in (-1, 0, 1):
                for dj in (-1, 0, 1):
                    h, w_ = i + di, j + dj
                    if 0 <= h < H and 0 <= w_ < W:
                        inb = (h * W + w_) * C
                        P[inb + cidx, o + cidx] += 1.0 / 9.0
    return P


def make_params(key, T, D, dim=128):
    """Deterministic parameters matching the module's __init__ shapes.
    Returns (folded, raw):
      folded: 9 arrays fed to the fused kernel
              (m1,b1, m2,b2, m3,b3, m4,b4, m5) -- BN scale folded into m_l.
      raw:    per-layer (w (3,3,Cin,Cout), scale (Cout,), bias (Cout,)) for the
              plain-JAX reference check."""
    out_channels = [4, 16, 64, dim]
    eps = 1e-5
    in_channel = 1
    H, W = T, D
    prev_pool = None
    folded, raw = [], []
    for cout in out_channels:
        key, k_w, k_b = jax.random.split(key, 3)
        fan_in = in_channel * 9
        w = (jax.random.normal(k_w, (3, 3, in_channel, cout), jnp.float32)
             / jnp.sqrt(fan_in))
        conv_b = jax.random.normal(k_b, (cout,), jnp.float32) * 0.01
        # BatchNorm2d at init (eval mode): gamma=1, beta=0, mean=0, var=1
        gamma = jnp.ones((cout,), jnp.float32)
        beta = jnp.zeros((cout,), jnp.float32)
        run_mean = jnp.zeros((cout,), jnp.float32)
        run_var = jnp.ones((cout,), jnp.float32)
        scale = gamma / jnp.sqrt(run_var + eps)                # per-channel scale
        bias = conv_b * scale + (beta - run_mean * scale)      # folded bias
        raw.append((w, scale, bias))

        cmat, Ho, Wo = _conv_as_matrix(np.asarray(w), H, W, stride=2, pad=1)
        m = cmat if prev_pool is None else prev_pool @ cmat    # compose pool_{l-1}
        # Fold the per-channel BN scale into the matrix COLUMNS so the kernel
        # epilogue is just bias + ReLU (one VPU add + one max per layer).
        s_vec = np.tile(np.asarray(scale, np.float32), Ho * Wo)[None, :]
        b_vec = np.tile(np.asarray(bias, np.float32), Ho * Wo)[None, :]
        m = m * s_vec
        folded += [jnp.asarray(m), jnp.asarray(b_vec)]

        prev_pool = _avgpool3x3_as_matrix(Ho, Wo, cout)
        in_channel, H, W = cout, Ho, Wo

    # Final: last layer's AvgPool composed with AdaptiveAvgPool2d(1) + flatten.
    s_last = H * W
    gmat = np.zeros((s_last * in_channel, in_channel), np.float32)
    cidx = np.arange(in_channel)
    for s in range(s_last):
        gmat[s * in_channel + cidx, cidx] = 1.0 / s_last
    folded.append(jnp.asarray(prev_pool @ gmat))
    return tuple(folded), raw


# ---------------------------------------------------------------------------
# Plain-JAX (XLA) reference of the PyTorch module, used only for validation.
# ---------------------------------------------------------------------------
def reference_forward(x, raw):
    h = x[:, None, :, :]                                       # (B,1,T,D) NCHW
    for w, scale, bias in raw:
        w_oihw = jnp.transpose(w, (3, 2, 0, 1))                # (Cout,Cin,3,3)
        h = jax.lax.conv_general_dilated(
            h, w_oihw, window_strides=(2, 2), padding=((1, 1), (1, 1)),
            dimension_numbers=("NCHW", "OIHW", "NCHW"),
            precision=jax.lax.Precision.HIGHEST)
        h = h * scale[None, :, None, None] + bias[None, :, None, None]
        h = jnp.maximum(h, 0.0)
        # AvgPool2d(3, 1, padding=1), count_include_pad=True  ->  /9 always
        h = jax.lax.reduce_window(
            h, 0.0, jax.lax.add, (1, 1, 3, 3), (1, 1, 1, 1),
            ((0, 0), (0, 0), (1, 1), (1, 1))) / 9.0
    return jnp.mean(h, axis=(2, 3))                            # AdaptiveAvgPool2d(1)


if __name__ == "__main__":
    key = jax.random.PRNGKey(0)
    kx, kp = jax.random.split(key)
    B, T, D = 2, 16, 16
    dim = 128
    x = jax.random.normal(kx, (B, T, D), jnp.float32)
    folded, raw = make_params(kp, T, D, dim=dim)

    out = jax.jit(lambda xx: encoder_forward(xx, folded))(x)
    out = jax.block_until_ready(out)
    assert out.shape == (B, dim), out.shape
    assert bool(jnp.all(jnp.isfinite(out)))

    # Validate the fused Pallas kernel against the plain-JAX reference.
    ref = jax.block_until_ready(reference_forward(x, raw))
    err = float(jnp.max(jnp.abs(out - ref)))
    assert err < 2e-3, f"mismatch vs XLA reference: max |diff| = {err}"

    print("KERNEL_OK")
</pallas_src>

<mosaic_0001>
module attributes {stable_mosaic.version = 11 : i64} {
  func.func @encoder_fused_kernel(%arg0: memref<2x256xf32, #tpu.memory_space<vmem>>, %arg1: memref<256x256xf32, #tpu.memory_space<vmem>>, %arg2: memref<1x256xf32, #tpu.memory_space<vmem>>, %arg3: memref<256x256xf32, #tpu.memory_space<vmem>>, %arg4: memref<1x256xf32, #tpu.memory_space<vmem>>, %arg5: memref<256x256xf32, #tpu.memory_space<vmem>>, %arg6: memref<1x256xf32, #tpu.memory_space<vmem>>, %arg7: memref<256x128xf32, #tpu.memory_space<vmem>>, %arg8: memref<1x128xf32, #tpu.memory_space<vmem>>, %arg9: memref<128x128xf32, #tpu.memory_space<vmem>>, %arg10: memref<2x128xf32, #tpu.memory_space<vmem>>) attributes {dimension_semantics = [], scalar_prefetch = 0 : i64, scratch_operands = 0 : i64, tpu.core_type = #tpu.core_type<tc>} {
    %c0 = arith.constant 0 : index
    %c0_0 = arith.constant 0 : index
    %0 = vector.load %arg0[%c0, %c0_0] : memref<2x256xf32, #tpu.memory_space<vmem>>, vector<2x256xf32>
    %c0_1 = arith.constant 0 : index
    %c0_2 = arith.constant 0 : index
    %1 = vector.load %arg1[%c0_1, %c0_2] : memref<256x256xf32, #tpu.memory_space<vmem>>, vector<256x256xf32>
    %cst = arith.constant dense<0.000000e+00> : vector<2x256xf32>
    %2 = tpu.matmul %0, %1, %cst {dimension_numbers = #tpu.dot_dimension_numbers<[1], [0], [0], [1], [0, 0, 1, 1], [], []>} : vector<2x256xf32>, vector<256x256xf32>, vector<2x256xf32> -> vector<2x256xf32>
    %c0_3 = arith.constant 0 : index
    %c0_4 = arith.constant 0 : index
    %3 = vector.load %arg2[%c0_3, %c0_4] : memref<1x256xf32, #tpu.memory_space<vmem>>, vector<1x256xf32>
    %4 = vector.broadcast %3 : vector<1x256xf32> to vector<2x256xf32>
    %5 = arith.addf %2, %4 : vector<2x256xf32>
    %cst_5 = arith.constant 0.000000e+00 : f32
    %6 = vector.broadcast %cst_5 : f32 to vector<2x256xf32>
    %7 = arith.maximumf %5, %6 : vector<2x256xf32>
    %c0_6 = arith.constant 0 : index
    %c0_7 = arith.constant 0 : index
    %8 = vector.load %arg3[%c0_6, %c0_7] : memref<256x256xf32, #tpu.memory_space<vmem>>, vector<256x256xf32>
    %cst_8 = arith.constant dense<0.000000e+00> : vector<2x256xf32>
    %9 = tpu.matmul %7, %8, %cst_8 {dimension_numbers = #tpu.dot_dimension_numbers<[1], [0], [0], [1], [0, 0, 1, 1], [], []>} : vector<2x256xf32>, vector<256x256xf32>, vector<2x256xf32> -> vector<2x256xf32>
    %c0_9 = arith.constant 0 : index
    %c0_10 = arith.constant 0 : index
    %10 = vector.load %arg4[%c0_9, %c0_10] : memref<1x256xf32, #tpu.memory_space<vmem>>, vector<1x256xf32>
    %11 = vector.broadcast %10 : vector<1x256xf32> to vector<2x256xf32>
    %12 = arith.addf %9, %11 : vector<2x256xf32>
    %cst_11 = arith.constant 0.000000e+00 : f32
    %13 = vector.broadcast %cst_11 : f32 to vector<2x256xf32>
    %14 = arith.maximumf %12, %13 : vector<2x256xf32>
    %c0_12 = arith.constant 0 : index
    %c0_13 = arith.constant 0 : index
    %15 = vector.load %arg5[%c0_12, %c0_13] : memref<256x256xf32, #tpu.memory_space<vmem>>, vector<256x256xf32>
    %cst_14 = arith.constant dense<0.000000e+00> : vector<2x256xf32>
    %16 = tpu.matmul %14, %15, %cst_14 {dimension_numbers = #tpu.dot_dimension_numbers<[1], [0], [0], [1], [0, 0, 1, 1], [], []>} : vector<2x256xf32>, vector<256x256xf32>, vector<2x256xf32> -> vector<2x256xf32>
    %c0_15 = arith.constant 0 : index
    %c0_16 = arith.constant 0 : index
    %17 = vector.load %arg6[%c0_15, %c0_16] : memref<1x256xf32, #tpu.memory_space<vmem>>, vector<1x256xf32>
    %18 = vector.broadcast %17 : vector<1x256xf32> to vector<2x256xf32>
    %19 = arith.addf %16, %18 : vector<2x256xf32>
    %cst_17 = arith.constant 0.000000e+00 : f32
    %20 = vector.broadcast %cst_17 : f32 to vector<2x256xf32>
    %21 = arith.maximumf %19, %20 : vector<2x256xf32>
    %c0_18 = arith.constant 0 : index
    %c0_19 = arith.constant 0 : index
    %22 = vector.load %arg7[%c0_18, %c0_19] : memref<256x128xf32, #tpu.memory_space<vmem>>, vector<256x128xf32>
    %cst_20 = arith.constant dense<0.000000e+00> : vector<2x128xf32>
    %23 = tpu.matmul %21, %22, %cst_20 {dimension_numbers = #tpu.dot_dimension_numbers<[1], [0], [0], [1], [0, 0, 1, 1], [], []>} : vector<2x256xf32>, vector<256x128xf32>, vector<2x128xf32> -> vector<2x128xf32>
    %c0_21 = arith.constant 0 : index
    %c0_22 = arith.constant 0 : index
    %24 = vector.load %arg8[%c0_21, %c0_22] : memref<1x128xf32, #tpu.memory_space<vmem>>, vector<1x128xf32>
    %25 = vector.broadcast %24 : vector<1x128xf32> to vector<2x128xf32>
    %26 = arith.addf %23, %25 : vector<2x128xf32>
    %cst_23 = arith.constant 0.000000e+00 : f32
    %27 = vector.broadcast %cst_23 : f32 to vector<2x128xf32>
    %28 = arith.maximumf %26, %27 : vector<2x128xf32>
    %c0_24 = arith.constant 0 : index
    %c0_25 = arith.constant 0 : index
    %29 = vector.load %arg9[%c0_24, %c0_25] : memref<128x128xf32, #tpu.memory_space<vmem>>, vector<128x128xf32>
    %cst_26 = arith.constant dense<0.000000e+00> : vector<2x128xf32>
    %30 = tpu.matmul %28, %29, %cst_26 {dimension_numbers = #tpu.dot_dimension_numbers<[1], [0], [0], [1], [0, 0, 1, 1], [], []>} : vector<2x128xf32>, vector<128x128xf32>, vector<2x128xf32> -> vector<2x128xf32>
    %c0_27 = arith.constant 0 : index
    %c0_28 = arith.constant 0 : index
    %31 = vector.load %arg10[%c0_27, %c0_28] : memref<2x128xf32, #tpu.memory_space<vmem>>, vector<2x128xf32>
    tpu.vector_store %arg10[%c0_27, %c0_28], %30 {strides = array<i32>} : memref<2x128xf32, #tpu.memory_space<vmem>>, vector<2x128xf32>,
    return
  }
}

</mosaic_0001>

<llo_original>
// kernel: _lambda_.1
$region0: #{_lambda_.1}
  #allocation0 [shape = 'u32[]', space=smem, size = 0x4, offset = 0x4, fixed_abs, tag = 'smem constant byte address 0x4 - core index']
  #allocation1 [shape = 'u32[72,128]{1,0:T(1,128)}', space=vmem, size = 0x9000, scoped, tag = 'internal scratch']
  %s0 = inlined_call_operand.vmem [shape: f32[2,256], index: 0, kind: input, shape index: {}]
  %s1 = inlined_call_operand.hbm [shape: f32[256,256], index: 1, kind: input, shape index: {}]
  %s2 = inlined_call_operand.vmem [shape: f32[1,256], index: 2, kind: input, shape index: {}]
  %s3 = inlined_call_operand.hbm [shape: f32[256,256], index: 3, kind: input, shape index: {}]
  %s4 = inlined_call_operand.vmem [shape: f32[1,256], index: 4, kind: input, shape index: {}]
  %s5 = inlined_call_operand.hbm [shape: f32[256,256], index: 5, kind: input, shape index: {}]
  %s6 = inlined_call_operand.vmem [shape: f32[1,256], index: 6, kind: input, shape index: {}]
  %s7 = inlined_call_operand.hbm [shape: f32[256,128], index: 7, kind: input, shape index: {}]
  %s8 = inlined_call_operand.vmem [shape: f32[1,128], index: 8, kind: input, shape index: {}]
  %s9 = inlined_call_operand.hbm [shape: f32[128,128], index: 9, kind: input, shape index: {}]
  %s10 = inlined_call_operand.hbm [shape: f32[2,128], index: 10, kind: output, shape index: {}]
  %s11 = sld [smem:[#allocation0]]
  $region70: #{_lambda_.1} parent=0
    _
  %s13 = ssub.s32 1, %s11
  %s14 = scalar_select 0, %s13, %s11
  $region1: #{_lambda_.1} parent=0
    #allocation2 [shape = 'u8[262144]{0}', space=vmem, size = 0x40000, scoped, tag = 'input window, operand 1, single buffered']
    #allocation3 [shape = 's32[1]{0}', space=sflag, size = 0x4, scoped, tag = 'scoped memory for _lambda_.1']
    #allocation4 [shape = 's32[1]{0}', space=sflag, size = 0x4, scoped, tag = 'scoped memory for _lambda_.1']
    #allocation5 [shape = 'u8[262144]{0}', space=vmem, size = 0x40000, scoped, tag = 'input window, operand 3, single buffered']
    #allocation6 [shape = 's32[1]{0}', space=sflag, size = 0x4, scoped, tag = 'scoped memory for _lambda_.1']
    #allocation7 [shape = 'u8[262144]{0}', space=vmem, size = 0x40000, scoped, tag = 'input window, operand 5, single buffered']
    #allocation8 [shape = 'u8[131072]{0}', space=vmem, size = 0x20000, scoped, tag = 'input window, operand 7, single buffered']
    #allocation9 [shape = 's32[1]{0}', space=sflag, size = 0x4, scoped, tag = 'scoped memory for _lambda_.1']
    #allocation10 [shape = 'u8[65536]{0}', space=vmem, size = 0x10000, scoped, tag = 'input window, operand 9, single buffered']
    #allocation11 [shape = 'u8[1024]{0}', space=vmem, size = 0x400, scoped, tag = 'output window, operand 0, single buffered']
    %15 = vsyncpa [#allocation3], 0
    %16 = vsyncpa [#allocation6], 0
    %17 = vsyncpa [#allocation9], 0
    %18 = vsyncpa [#allocation4], 0
    // Predicated region
    $region2: #{_lambda_.1} parent=1 // pred_check
      _
    $region3: #{_lambda_.1} parent=1 // pred_check_branch
      %20 = sbr.rel (0) target = $region5
    $region4: #{_lambda_.1} parent=1 // pred_region
      _
    $region5: #{_lambda_.1} parent=1 // pred_fallthru
      _
    // Predicated region
    $region6: #{_lambda_.1} parent=1 // pred_check
      _
    $region7: #{_lambda_.1} parent=1 // pred_check_branch
      %22 = sbr.rel (0) target = $region9
    $region8: #{_lambda_.1} parent=1 // pred_region
      %24 = vsyncadd [#allocation3], 0
      %s25 = sshll.u32 %s1, 4
      %s26 = int_to_ptr.hbm [resolvable:$true] %s25
      %s27 = sshll.u32 [#allocation2], 4
      %s28 = int_to_ptr.vmem [resolvable:$true] %s27
      %33 = dma.hbm_to_vmem [thread:$0]  %s26, 8192, %s28, [#allocation3], 256, 256, 16
    $region9: #{_lambda_.1} parent=1 // pred_fallthru
      _
    // Predicated region
    $region10: #{_lambda_.1} parent=1 // pred_check
      _
    $region11: #{_lambda_.1} parent=1 // pred_check_branch
      %35 = sbr.rel (0) target = $region13
    $region12: #{_lambda_.1} parent=1 // pred_region
      _
    $region13: #{_lambda_.1} parent=1 // pred_fallthru
      _
    // Predicated region
    $region14: #{_lambda_.1} parent=1 // pred_check
      _
    $region15: #{_lambda_.1} parent=1 // pred_check_branch
      %37 = sbr.rel (0) target = $region17
    $region16: #{_lambda_.1} parent=1 // pred_region
      %39 = vsyncadd [#allocation6], 0
      %s40 = sshll.u32 %s3, 4
      %s41 = int_to_ptr.hbm [resolvable:$true] %s40
      %s42 = sshll.u32 [#allocation5], 4
      %s43 = int_to_ptr.vmem [resolvable:$true] %s42
      %48 = dma.hbm_to_vmem [thread:$0]  %s41, 8192, %s43, [#allocation6], 256, 256, 16
    $region17: #{_lambda_.1} parent=1 // pred_fallthru
      _
    // Predicated region
    $region18: #{_lambda_.1} parent=1 // pred_check
      _
    $region19: #{_lambda_.1} parent=1 // pred_check_branch
      %50 = sbr.rel (0) target = $region21
    $region20: #{_lambda_.1} parent=1 // pred_region
      _
    $region21: #{_lambda_.1} parent=1 // pred_fallthru
      _
    // Predicated region
    $region22: #{_lambda_.1} parent=1 // pred_check
      _
    $region23: #{_lambda_.1} parent=1 // pred_check_branch
      %52 = sbr.rel (0) target = $region25
    $region24: #{_lambda_.1} parent=1 // pred_region
      %54 = vsyncadd [#allocation6], 0
      %s55 = sshll.u32 %s5, 4
      %s56 = int_to_ptr.hbm [resolvable:$true] %s55
      %s57 = sshll.u32 [#allocation7], 4
      %s58 = int_to_ptr.vmem [resolvable:$true] %s57
      %63 = dma.hbm_to_vmem [thread:$0]  %s56, 8192, %s58, [#allocation6], 256, 256, 16
    $region25: #{_lambda_.1} parent=1 // pred_fallthru
      _
    // Predicated region
    $region26: #{_lambda_.1} parent=1 // pred_check
      _
    $region27: #{_lambda_.1} parent=1 // pred_check_branch
      %65 = sbr.rel (0) target = $region29
    $region28: #{_lambda_.1} parent=1 // pred_region
      _
    $region29: #{_lambda_.1} parent=1 // pred_fallthru
      _
    // Predicated region
    $region30: #{_lambda_.1} parent=1 // pred_check
      _
    $region31: #{_lambda_.1} parent=1 // pred_check_branch
      %67 = sbr.rel (0) target = $region33
    $region32: #{_lambda_.1} parent=1 // pred_region
      %69 = vsyncadd [#allocation9], 0
      %s70 = sshll.u32 %s7, 4
      %s71 = int_to_ptr.hbm [resolvable:$true] %s70
      %s72 = sshll.u32 [#allocation8], 4
      %s73 = int_to_ptr.vmem [resolvable:$true] %s72
      %78 = dma.hbm_to_vmem [thread:$0]  %s71, 4096, %s73, [#allocation9], 128, 128, 8
    $region33: #{_lambda_.1} parent=1 // pred_fallthru
      _
    // Predicated region
    $region34: #{_lambda_.1} parent=1 // pred_check
      _
    $region35: #{_lambda_.1} parent=1 // pred_check_branch
      %80 = sbr.rel (0) target = $region37
    $region36: #{_lambda_.1} parent=1 // pred_region
      _
    $region37: #{_lambda_.1} parent=1 // pred_fallthru
      _
    // Predicated region
    $region38: #{_lambda_.1} parent=1 // pred_check
      _
    $region39: #{_lambda_.1} parent=1 // pred_check_branch
      %82 = sbr.rel (0) target = $region41
    $region40: #{_lambda_.1} parent=1 // pred_region
      %84 = vsyncadd [#allocation9], 0
      %s85 = sshll.u32 %s9, 4
      %s86 = int_to_ptr.hbm [resolvable:$true] %s85
      %s87 = sshll.u32 [#allocation10], 4
      %s88 = int_to_ptr.vmem [resolvable:$true] %s87
      %93 = dma.hbm_to_vmem [thread:$0]  %s86, 2048, %s88, [#allocation9], 128, 128, 8
    $region41: #{_lambda_.1} parent=1 // pred_fallthru
      _
    // Predicated region
    $region42: #{_lambda_.1} parent=1 // pred_check
      _
    $region43: #{_lambda_.1} parent=1 // pred_check_branch
      %95 = sbr.rel (0) target = $region45
    $region44: #{_lambda_.1} parent=1 // pred_region
      %97 = dma.done [#allocation3], 8192
    $region45: #{_lambda_.1} parent=1 // pred_fallthru
      _
    // Predicated region
    $region46: #{_lambda_.1} parent=1 // pred_check
      _
    $region47: #{_lambda_.1} parent=1 // pred_check_branch
      %99 = sbr.rel (0) target = $region49
    $region48: #{_lambda_.1} parent=1 // pred_region
      %101 = dma.done [#allocation6], 8192
    $region49: #{_lambda_.1} parent=1 // pred_fallthru
      _
    // Predicated region
    $region50: #{_lambda_.1} parent=1 // pred_check
      _
    $region51: #{_lambda_.1} parent=1 // pred_check_branch
      %103 = sbr.rel (0) target = $region53
    $region52: #{_lambda_.1} parent=1 // pred_region
      %105 = dma.done [#allocation6], 8192
    $region53: #{_lambda_.1} parent=1 // pred_fallthru
      _
    // Predicated region
    $region54: #{_lambda_.1} parent=1 // pred_check
      _
    $region55: #{_lambda_.1} parent=1 // pred_check_branch
      %107 = sbr.rel (0) target = $region57
    $region56: #{_lambda_.1} parent=1 // pred_region
      %109 = dma.done [#allocation9], 4096
    $region57: #{_lambda_.1} parent=1 // pred_fallthru
      _
    // Predicated region
    $region58: #{_lambda_.1} parent=1 // pred_check
      _
    $region59: #{_lambda_.1} parent=1 // pred_check_branch
      %111 = sbr.rel (0) target = $region61
    $region60: #{_lambda_.1} parent=1 // pred_region
      %113 = dma.done [#allocation9], 2048
    $region61: #{_lambda_.1} parent=1 // pred_fallthru
      _
    %v114 = vld [vmem:[%s0] sm:$0xf]
    %v115 = vld [vmem:[#allocation2] sm:$0xff]
    %v116 = vld [vmem:[#allocation2 + $0x8] sm:$0xff]
    %v117 = vld [vmem:[#allocation2 + $0x10] sm:$0xff]
    %v118 = vld [vmem:[#allocation2 + $0x18] sm:$0xff]
    %v119 = vld [vmem:[#allocation2 + $0x20] sm:$0xff]
    %v120 = vld [vmem:[#allocation2 + $0x28] sm:$0xff]
    %v121 = vld [vmem:[#allocation2 + $0x30] sm:$0xff]
    %v122 = vld [vmem:[#allocation2 + $0x38] sm:$0xff]
    %v123 = vld [vmem:[#allocation2 + $0x40] sm:$0xff]
    %v124 = vld [vmem:[#allocation2 + $0x48] sm:$0xff]
    %v125 = vld [vmem:[#allocation2 + $0x50] sm:$0xff]
    %v126 = vld [vmem:[#allocation2 + $0x58] sm:$0xff]
    %v127 = vld [vmem:[#allocation2 + $0x60] sm:$0xff]
    %v128 = vld [vmem:[#allocation2 + $0x68] sm:$0xff]
    %v129 = vld [vmem:[#allocation2 + $0x70] sm:$0xff]
    %v130 = vld [vmem:[#allocation2 + $0x78] sm:$0xff]
    %v131 = vld [vmem:[#allocation2 + $0x80] sm:$0xff]
    %v132 = vld [vmem:[#allocation2 + $0x88] sm:$0xff]
    %v133 = vld [vmem:[#allocation2 + $0x90] sm:$0xff]
    %v134 = vld [vmem:[#allocation2 + $0x98] sm:$0xff]
    %v135 = vld [vmem:[#allocation2 + $0xa0] sm:$0xff]
    %v136 = vld [vmem:[#allocation2 + $0xa8] sm:$0xff]
    %v137 = vld [vmem:[#allocation2 + $0xb0] sm:$0xff]
    %v138 = vld [vmem:[#allocation2 + $0xb8] sm:$0xff]
    %v139 = vld [vmem:[#allocation2 + $0xc0] sm:$0xff]
    %v140 = vld [vmem:[#allocation2 + $0xc8] sm:$0xff]
    %v141 = vld [vmem:[#allocation2 + $0xd0] sm:$0xff]
    %v142 = vld [vmem:[#allocation2 + $0xd8] sm:$0xff]
    %v143 = vld [vmem:[#allocation2 + $0xe0] sm:$0xff]
    %v144 = vld [vmem:[#allocation2 + $0xe8] sm:$0xff]
    %v145 = vld [vmem:[#allocation2 + $0xf0] sm:$0xff]
    %v146 = vld [vmem:[#allocation2 + $0xf8] sm:$0xff]
    %v147 = vld [vmem:[#allocation2 + $0x100] sm:$0xff]
    %v148 = vld [vmem:[#allocation2 + $0x108] sm:$0xff]
    %v149 = vld [vmem:[#allocation2 + $0x110] sm:$0xff]
    %v150 = vld [vmem:[#allocation2 + $0x118] sm:$0xff]
    %v151 = vld [vmem:[#allocation2 + $0x120] sm:$0xff]
    %v152 = vld [vmem:[#allocation2 + $0x128] sm:$0xff]
    %v153 = vld [vmem:[#allocation2 + $0x130] sm:$0xff]
    %v154 = vld [vmem:[#allocation2 + $0x138] sm:$0xff]
    %v155 = vld [vmem:[#allocation2 + $0x140] sm:$0xff]
    %v156 = vld [vmem:[#allocation2 + $0x148] sm:$0xff]
    %v157 = vld [vmem:[#allocation2 + $0x150] sm:$0xff]
    %v158 = vld [vmem:[#allocation2 + $0x158] sm:$0xff]
    %v159 = vld [vmem:[#allocation2 + $0x160] sm:$0xff]
    %v160 = vld [vmem:[#allocation2 + $0x168] sm:$0xff]
    %v161 = vld [vmem:[#allocation2 + $0x170] sm:$0xff]
    %v162 = vld [vmem:[#allocation2 + $0x178] sm:$0xff]
    %v163 = vld [vmem:[#allocation2 + $0x180] sm:$0xff]
    %v164 = vld [vmem:[#allocation2 + $0x188] sm:$0xff]
    %v165 = vld [vmem:[#allocation2 + $0x190] sm:$0xff]
    %v166 = vld [vmem:[#allocation2 + $0x198] sm:$0xff]
    %v167 = vld [vmem:[#allocation2 + $0x1a0] sm:$0xff]
    %v168 = vld [vmem:[#allocation2 + $0x1a8] sm:$0xff]
    %v169 = vld [vmem:[#allocation2 + $0x1b0] sm:$0xff]
    %v170 = vld [vmem:[#allocation2 + $0x1b8] sm:$0xff]
    %v171 = vld [vmem:[#allocation2 + $0x1c0] sm:$0xff]
    %v172 = vld [vmem:[#allocation2 + $0x1c8] sm:$0xff]
    %v173 = vld [vmem:[#allocation2 + $0x1d0] sm:$0xff]
    %v174 = vld [vmem:[#allocation2 + $0x1d8] sm:$0xff]
    %v175 = vld [vmem:[#allocation2 + $0x1e0] sm:$0xff]
    %v176 = vld [vmem:[#allocation2 + $0x1e8] sm:$0xff]
    %v177 = vld [vmem:[#allocation2 + $0x1f0] sm:$0xff]
    %v178 = vld [vmem:[#allocation2 + $0x1f8] sm:$0xff]
    %v179 = vld [vmem:[%s2] sm:$0x3]
    %v181 = vperm.slane %v179, 0
    %v182 = vperm.slane %v179, 1
    %186 = vst [vmem:[#allocation1] ss:$4 sm:$0xff] %v114
    %v187 = vld.sshfl [vmem:[#allocation1] sm:$0xff pattern:$0x73625140]
    %v188 = vld.sshfl [vmem:[#allocation1 + $0x8] sm:$0xff pattern:$0x73625140]
    %191 = vmatpush.msra.mxu0 %v145
    %192 = vmatpush.msra.mxu0 %v143
    %193 = vmatpush.msra.mxu0 %v141
    %194 = vmatpush.msra.mxu0 %v139
    %195 = vmatpush.msra.mxu0 %v137
    %196 = vmatpush.msra.mxu0 %v135
    %197 = vmatpush.msra.mxu0 %v133
    %198 = vmatpush.msra.mxu0 %v131
    %199 = vmatpush.msra.mxu0 %v129
    %200 = vmatpush.msra.mxu0 %v127
    %201 = vmatpush.msra.mxu0 %v125
    %202 = vmatpush.msra.mxu0 %v123
    %203 = vmatpush.msra.mxu0 %v121
    %204 = vmatpush.msra.mxu0 %v119
    %205 = vmatpush.msra.mxu0 %v117
    %206 = vmatpush.msra.mxu0 %v115
    %207 = vmatmul.f32.gmra.mxu0 %v187
    %v208 = vpop.f32.mrf.mxu0
    %v209 = vadd.f32 %v181, %v208
    %210 = vdwg.mxu0
    %211 = vmatpush.msra.mxu0 %v177
    %212 = vmatpush.msra.mxu0 %v175
    %213 = vmatpush.msra.mxu0 %v173
    %214 = vmatpush.msra.mxu0 %v171
    %215 = vmatpush.msra.mxu0 %v169
    %216 = vmatpush.msra.mxu0 %v167
    %217 = vmatpush.msra.mxu0 %v165
    %218 = vmatpush.msra.mxu0 %v163
    %219 = vmatpush.msra.mxu0 %v161
    %220 = vmatpush.msra.mxu0 %v159
    %221 = vmatpush.msra.mxu0 %v157
    %222 = vmatpush.msra.mxu0 %v155
    %223 = vmatpush.msra.mxu0 %v153
    %224 = vmatpush.msra.mxu0 %v151
    %225 = vmatpush.msra.mxu0 %v149
    %226 = vmatpush.msra.mxu0 %v147
    %227 = vmatmul.f32.gmra.mxu0 %v188
    %v228 = vpop.f32.mrf.mxu0
    %v229 = vadd.f32 %v209, %v228
    %230 = vdwg.mxu0
    %231 = vmatpush.msra.mxu0 %v146
    %232 = vmatpush.msra.mxu0 %v144
    %233 = vmatpush.msra.mxu0 %v142
    %234 = vmatpush.msra.mxu0 %v140
    %235 = vmatpush.msra.mxu0 %v138
    %236 = vmatpush.msra.mxu0 %v136
    %237 = vmatpush.msra.mxu0 %v134
    %238 = vmatpush.msra.mxu0 %v132
    %239 = vmatpush.msra.mxu0 %v130
    %240 = vmatpush.msra.mxu0 %v128
    %241 = vmatpush.msra.mxu0 %v126
    %242 = vmatpush.msra.mxu0 %v124
    %243 = vmatpush.msra.mxu0 %v122
    %244 = vmatpush.msra.mxu0 %v120
    %245 = vmatpush.msra.mxu0 %v118
    %246 = vmatpush.msra.mxu0 %v116
    %247 = vmatmul.f32.gmra.mxu0 %v187
    %v248 = vpop.f32.mrf.mxu0
    %v249 = vadd.f32 %v182, %v248
    %250 = vdwg.mxu0
    %251 = vmatpush.msra.mxu0 %v178
    %252 = vmatpush.msra.mxu0 %v176
    %253 = vmatpush.msra.mxu0 %v174
    %254 = vmatpush.msra.mxu0 %v172
    %255 = vmatpush.msra.mxu0 %v170
    %256 = vmatpush.msra.mxu0 %v168
    %257 = vmatpush.msra.mxu0 %v166
    %258 = vmatpush.msra.mxu0 %v164
    %259 = vmatpush.msra.mxu0 %v162
    %260 = vmatpush.msra.mxu0 %v160
    %261 = vmatpush.msra.mxu0 %v158
    %262 = vmatpush.msra.mxu0 %v156
    %263 = vmatpush.msra.mxu0 %v154
    %264 = vmatpush.msra.mxu0 %v152
    %265 = vmatpush.msra.mxu0 %v150
    %266 = vmatpush.msra.mxu0 %v148
    %267 = vmatmul.f32.gmra.mxu0 %v188
    %v268 = vpop.f32.mrf.mxu0
    %v269 = vadd.f32 %v249, %v268
    %270 = vdwg.mxu0
    %v271 = vmax.f32 %v229, 0.0
    %v272 = vmax.f32 %v269, 0.0
    %v273 = vld [vmem:[#allocation5] sm:$0xff]
    %v274 = vld [vmem:[#allocation5 + $0x8] sm:$0xff]
    %v275 = vld [vmem:[#allocation5 + $0x10] sm:$0xff]
    %v276 = vld [vmem:[#allocation5 + $0x18] sm:$0xff]
    %v277 = vld [vmem:[#allocation5 + $0x20] sm:$0xff]
    %v278 = vld [vmem:[#allocation5 + $0x28] sm:$0xff]
    %v279 = vld [vmem:[#allocation5 + $0x30] sm:$0xff]
    %v280 = vld [vmem:[#allocation5 + $0x38] sm:$0xff]
    %v281 = vld [vmem:[#allocation5 + $0x40] sm:$0xff]
    %v282 = vld [vmem:[#allocation5 + $0x48] sm:$0xff]
    %v283 = vld [vmem:[#allocation5 + $0x50] sm:$0xff]
    %v284 = vld [vmem:[#allocation5 + $0x58] sm:$0xff]
    %v285 = vld [vmem:[#allocation5 + $0x60] sm:$0xff]
    %v286 = vld [vmem:[#allocation5 + $0x68] sm:$0xff]
    %v287 = vld [vmem:[#allocation5 + $0x70] sm:$0xff]
    %v288 = vld [vmem:[#allocation5 + $0x78] sm:$0xff]
    %v289 = vld [vmem:[#allocation5 + $0x80] sm:$0xff]
    %v290 = vld [vmem:[#allocation5 + $0x88] sm:$0xff]
    %v291 = vld [vmem:[#allocation5 + $0x90] sm:$0xff]
    %v292 = vld [vmem:[#allocation5 + $0x98] sm:$0xff]
    %v293 = vld [vmem:[#allocation5 + $0xa0] sm:$0xff]
    %v294 = vld [vmem:[#allocation5 + $0xa8] sm:$0xff]
    %v295 = vld [vmem:[#allocation5 + $0xb0] sm:$0xff]
    %v296 = vld [vmem:[#allocation5 + $0xb8] sm:$0xff]
    %v297 = vld [vmem:[#allocation5 + $0xc0] sm:$0xff]
    %v298 = vld [vmem:[#allocation5 + $0xc8] sm:$0xff]
    %v299 = vld [vmem:[#allocation5 + $0xd0] sm:$0xff]
    %v300 = vld [vmem:[#allocation5 + $0xd8] sm:$0xff]
    %v301 = vld [vmem:[#allocation5 + $0xe0] sm:$0xff]
    %v302 = vld [vmem:[#allocation5 + $0xe8] sm:$0xff]
    %v303 = vld [vmem:[#allocation5 + $0xf0] sm:$0xff]
    %v304 = vld [vmem:[#allocation5 + $0xf8] sm:$0xff]
    %v305 = vld [vmem:[#allocation5 + $0x100] sm:$0xff]
    %v306 = vld [vmem:[#allocation5 + $0x108] sm:$0xff]
    %v307 = vld [vmem:[#allocation5 + $0x110] sm:$0xff]
    %v308 = vld [vmem:[#allocation5 + $0x118] sm:$0xff]
    %v309 = vld [vmem:[#allocation5 + $0x120] sm:$0xff]
    %v310 = vld [vmem:[#allocation5 + $0x128] sm:$0xff]
    %v311 = vld [vmem:[#allocation5 + $0x130] sm:$0xff]
    %v312 = vld [vmem:[#allocation5 + $0x138] sm:$0xff]
    %v313 = vld [vmem:[#allocation5 + $0x140] sm:$0xff]
    %v314 = vld [vmem:[#allocation5 + $0x148] sm:$0xff]
    %v315 = vld [vmem:[#allocation5 + $0x150] sm:$0xff]
    %v316 = vld [vmem:[#allocation5 + $0x158] sm:$0xff]
    %v317 = vld [vmem:[#allocation5 + $0x160] sm:$0xff]
    %v318 = vld [vmem:[#allocation5 + $0x168] sm:$0xff]
    %v319 = vld [vmem:[#allocation5 + $0x170] sm:$0xff]
    %v320 = vld [vmem:[#allocation5 + $0x178] sm:$0xff]
    %v321 = vld [vmem:[#allocation5 + $0x180] sm:$0xff]
    %v322 = vld [vmem:[#allocation5 + $0x188] sm:$0xff]
    %v323 = vld [vmem:[#allocation5 + $0x190] sm:$0xff]
    %v324 = vld [vmem:[#allocation5 + $0x198] sm:$0xff]
    %v325 = vld [vmem:[#allocation5 + $0x1a0] sm:$0xff]
    %v326 = vld [vmem:[#allocation5 + $0x1a8] sm:$0xff]
    %v327 = vld [vmem:[#allocation5 + $0x1b0] sm:$0xff]
    %v328 = vld [vmem:[#allocation5 + $0x1b8] sm:$0xff]
    %v329 = vld [vmem:[#allocation5 + $0x1c0] sm:$0xff]
    %v330 = vld [vmem:[#allocation5 + $0x1c8] sm:$0xff]
    %v331 = vld [vmem:[#allocation5 + $0x1d0] sm:$0xff]
    %v332 = vld [vmem:[#allocation5 + $0x1d8] sm:$0xff]
    %v333 = vld [vmem:[#allocation5 + $0x1e0] sm:$0xff]
    %v334 = vld [vmem:[#allocation5 + $0x1e8] sm:$0xff]
    %v335 = vld [vmem:[#allocation5 + $0x1f0] sm:$0xff]
    %v336 = vld [vmem:[#allocation5 + $0x1f8] sm:$0xff]
    %v337 = vld [vmem:[%s4] sm:$0x3]
    %v339 = vperm.slane %v337, 0
    %v340 = vperm.slane %v337, 1
    %343 = vmatpush.msra.mxu0 %v303
    %344 = vmatpush.msra.mxu0 %v301
    %345 = vmatpush.msra.mxu0 %v299
    %346 = vmatpush.msra.mxu0 %v297
    %347 = vmatpush.msra.mxu0 %v295
    %348 = vmatpush.msra.mxu0 %v293
    %349 = vmatpush.msra.mxu0 %v291
    %350 = vmatpush.msra.mxu0 %v289
    %351 = vmatpush.msra.mxu0 %v287
    %352 = vmatpush.msra.mxu0 %v285
    %353 = vmatpush.msra.mxu0 %v283
    %354 = vmatpush.msra.mxu0 %v281
    %355 = vmatpush.msra.mxu0 %v279
    %356 = vmatpush.msra.mxu0 %v277
    %357 = vmatpush.msra.mxu0 %v275
    %358 = vmatpush.msra.mxu0 %v273
    %359 = vmatmul.f32.gmra.mxu0 %v271
    %v360 = vpop.f32.mrf.mxu0
    %v361 = vadd.f32 %v339, %v360
    %362 = vdwg.mxu0
    %363 = vmatpush.msra.mxu0 %v335
    %364 = vmatpush.msra.mxu0 %v333
    %365 = vmatpush.msra.mxu0 %v331
    %366 = vmatpush.msra.mxu0 %v329
    %367 = vmatpush.msra.mxu0 %v327
    %368 = vmatpush.msra.mxu0 %v325
    %369 = vmatpush.msra.mxu0 %v323
    %370 = vmatpush.msra.mxu0 %v321
    %371 = vmatpush.msra.mxu0 %v319
    %372 = vmatpush.msra.mxu0 %v317
    %373 = vmatpush.msra.mxu0 %v315
    %374 = vmatpush.msra.mxu0 %v313
    %375 = vmatpush.msra.mxu0 %v311
    %376 = vmatpush.msra.mxu0 %v309
    %377 = vmatpush.msra.mxu0 %v307
    %378 = vmatpush.msra.mxu0 %v305
    %379 = vmatmul.f32.gmra.mxu0 %v272
    %v380 = vpop.f32.mrf.mxu0
    %v381 = vadd.f32 %v361, %v380
    %382 = vdwg.mxu0
    %383 = vmatpush.msra.mxu0 %v304
    %384 = vmatpush.msra.mxu0 %v302
    %385 = vmatpush.msra.mxu0 %v300
    %386 = vmatpush.msra.mxu0 %v298
    %387 = vmatpush.msra.mxu0 %v296
    %388 = vmatpush.msra.mxu0 %v294
    %389 = vmatpush.msra.mxu0 %v292
    %390 = vmatpush.msra.mxu0 %v290
    %391 = vmatpush.msra.mxu0 %v288
    %392 = vmatpush.msra.mxu0 %v286
    %393 = vmatpush.msra.mxu0 %v284
    %394 = vmatpush.msra.mxu0 %v282
    %395 = vmatpush.msra.mxu0 %v280
    %396 = vmatpush.msra.mxu0 %v278
    %397 = vmatpush.msra.mxu0 %v276
    %398 = vmatpush.msra.mxu0 %v274
    %399 = vmatmul.f32.gmra.mxu0 %v271
    %v400 = vpop.f32.mrf.mxu0
    %v401 = vadd.f32 %v340, %v400
    %402 = vdwg.mxu0
    %403 = vmatpush.msra.mxu0 %v336
    %404 = vmatpush.msra.mxu0 %v334
    %405 = vmatpush.msra.mxu0 %v332
    %406 = vmatpush.msra.mxu0 %v330
    %407 = vmatpush.msra.mxu0 %v328
    %408 = vmatpush.msra.mxu0 %v326
    %409 = vmatpush.msra.mxu0 %v324
    %410 = vmatpush.msra.mxu0 %v322
    %411 = vmatpush.msra.mxu0 %v320
    %412 = vmatpush.msra.mxu0 %v318
    %413 = vmatpush.msra.mxu0 %v316
    %414 = vmatpush.msra.mxu0 %v314
    %415 = vmatpush.msra.mxu0 %v312
    %416 = vmatpush.msra.mxu0 %v310
    %417 = vmatpush.msra.mxu0 %v308
    %418 = vmatpush.msra.mxu0 %v306
    %419 = vmatmul.f32.gmra.mxu0 %v272
    %v420 = vpop.f32.mrf.mxu0
    %v421 = vadd.f32 %v401, %v420
    %422 = vdwg.mxu0
    %v423 = vmax.f32 %v381, 0.0
    %v424 = vmax.f32 %v421, 0.0
    %v425 = vld [vmem:[#allocation7] sm:$0xff]
    %v426 = vld [vmem:[#allocation7 + $0x8] sm:$0xff]
    %v427 = vld [vmem:[#allocation7 + $0x10] sm:$0xff]
    %v428 = vld [vmem:[#allocation7 + $0x18] sm:$0xff]
    %v429 = vld [vmem:[#allocation7 + $0x20] sm:$0xff]
    %v430 = vld [vmem:[#allocation7 + $0x28] sm:$0xff]
    %v431 = vld [vmem:[#allocation7 + $0x30] sm:$0xff]
    %v432 = vld [vmem:[#allocation7 + $0x38] sm:$0xff]
    %v433 = vld [vmem:[#allocation7 + $0x40] sm:$0xff]
    %v434 = vld [vmem:[#allocation7 + $0x48] sm:$0xff]
    %v435 = vld [vmem:[#allocation7 + $0x50] sm:$0xff]
    %v436 = vld [vmem:[#allocation7 + $0x58] sm:$0xff]
    %v437 = vld [vmem:[#allocation7 + $0x60] sm:$0xff]
    %v438 = vld [vmem:[#allocation7 + $0x68] sm:$0xff]
    %v439 = vld [vmem:[#allocation7 + $0x70] sm:$0xff]
    %v440 = vld [vmem:[#allocation7 + $0x78] sm:$0xff]
    %v441 = vld [vmem:[#allocation7 + $0x80] sm:$0xff]
    %v442 = vld [vmem:[#allocation7 + $0x88] sm:$0xff]
    %v443 = vld [vmem:[#allocation7 + $0x90] sm:$0xff]
    %v444 = vld [vmem:[#allocation7 + $0x98] sm:$0xff]
    %v445 = vld [vmem:[#allocation7 + $0xa0] sm:$0xff]
    %v446 = vld [vmem:[#allocation7 + $0xa8] sm:$0xff]
    %v447 = vld [vmem:[#allocation7 + $0xb0] sm:$0xff]
    %v448 = vld [vmem:[#allocation7 + $0xb8] sm:$0xff]
    %v449 = vld [vmem:[#allocation7 + $0xc0] sm:$0xff]
    %v450 = vld [vmem:[#allocation7 + $0xc8] sm:$0xff]
    %v451 = vld [vmem:[#allocation7 + $0xd0] sm:$0xff]
    %v452 = vld [vmem:[#allocation7 + $0xd8] sm:$0xff]
    %v453 = vld [vmem:[#allocation7 + $0xe0] sm:$0xff]
    %v454 = vld [vmem:[#allocation7 + $0xe8] sm:$0xff]
    %v455 = vld [vmem:[#allocation7 + $0xf0] sm:$0xff]
    %v456 = vld [vmem:[#allocation7 + $0xf8] sm:$0xff]
    %v457 = vld [vmem:[#allocation7 + $0x100] sm:$0xff]
    %v458 = vld [vmem:[#allocation7 + $0x108] sm:$0xff]
    %v459 = vld [vmem:[#allocation7 + $0x110] sm:$0xff]
    %v460 = vld [vmem:[#allocation7 + $0x118] sm:$0xff]
    %v461 = vld [vmem:[#allocation7 + $0x120] sm:$0xff]
    %v462 = vld [vmem:[#allocation7 + $0x128] sm:$0xff]
    %v463 = vld [vmem:[#allocation7 + $0x130] sm:$0xff]
    %v464 = vld [vmem:[#allocation7 + $0x138] sm:$0xff]
    %v465 = vld [vmem:[#allocation7 + $0x140] sm:$0xff]
    %v466 = vld [vmem:[#allocation7 + $0x148] sm:$0xff]
    %v467 = vld [vmem:[#allocation7 + $0x150] sm:$0xff]
    %v468 = vld [vmem:[#allocation7 + $0x158] sm:$0xff]
    %v469 = vld [vmem:[#allocation7 + $0x160] sm:$0xff]
    %v470 = vld [vmem:[#allocation7 + $0x168] sm:$0xff]
    %v471 = vld [vmem:[#allocation7 + $0x170] sm:$0xff]
    %v472 = vld [vmem:[#allocation7 + $0x178] sm:$0xff]
    %v473 = vld [vmem:[#allocation7 + $0x180] sm:$0xff]
    %v474 = vld [vmem:[#allocation7 + $0x188] sm:$0xff]
    %v475 = vld [vmem:[#allocation7 + $0x190] sm:$0xff]
    %v476 = vld [vmem:[#allocation7 + $0x198] sm:$0xff]
    %v477 = vld [vmem:[#allocation7 + $0x1a0] sm:$0xff]
    %v478 = vld [vmem:[#allocation7 + $0x1a8] sm:$0xff]
    %v479 = vld [vmem:[#allocation7 + $0x1b0] sm:$0xff]
    %v480 = vld [vmem:[#allocation7 + $0x1b8] sm:$0xff]
    %v481 = vld [vmem:[#allocation7 + $0x1c0] sm:$0xff]
    %v482 = vld [vmem:[#allocation7 + $0x1c8] sm:$0xff]
    %v483 = vld [vmem:[#allocation7 + $0x1d0] sm:$0xff]
    %v484 = vld [vmem:[#allocation7 + $0x1d8] sm:$0xff]
    %v485 = vld [vmem:[#allocation7 + $0x1e0] sm:$0xff]
    %v486 = vld [vmem:[#allocation7 + $0x1e8] sm:$0xff]
    %v487 = vld [vmem:[#allocation7 + $0x1f0] sm:$0xff]
    %v488 = vld [vmem:[#allocation7 + $0x1f8] sm:$0xff]
    %v489 = vld [vmem:[%s6] sm:$0x3]
    %v491 = vperm.slane %v489, 0
    %v492 = vperm.slane %v489, 1
    %495 = vmatpush.msra.mxu0 %v455
    %496 = vmatpush.msra.mxu0 %v453
    %497 = vmatpush.msra.mxu0 %v451
    %498 = vmatpush.msra.mxu0 %v449
    %499 = vmatpush.msra.mxu0 %v447
    %500 = vmatpush.msra.mxu0 %v445
    %501 = vmatpush.msra.mxu0 %v443
    %502 = vmatpush.msra.mxu0 %v441
    %503 = vmatpush.msra.mxu0 %v439
    %504 = vmatpush.msra.mxu0 %v437
    %505 = vmatpush.msra.mxu0 %v435
    %506 = vmatpush.msra.mxu0 %v433
    %507 = vmatpush.msra.mxu0 %v431
    %508 = vmatpush.msra.mxu0 %v429
    %509 = vmatpush.msra.mxu0 %v427
    %510 = vmatpush.msra.mxu0 %v425
    %511 = vmatmul.f32.gmra.mxu0 %v423
    %v512 = vpop.f32.mrf.mxu0
    %v513 = vadd.f32 %v491, %v512
    %514 = vdwg.mxu0
    %515 = vmatpush.msra.mxu0 %v487
    %516 = vmatpush.msra.mxu0 %v485
    %517 = vmatpush.msra.mxu0 %v483
    %518 = vmatpush.msra.mxu0 %v481
    %519 = vmatpush.msra.mxu0 %v479
    %520 = vmatpush.msra.mxu0 %v477
    %521 = vmatpush.msra.mxu0 %v475
    %522 = vmatpush.msra.mxu0 %v473
    %523 = vmatpush.msra.mxu0 %v471
    %524 = vmatpush.msra.mxu0 %v469
    %525 = vmatpush.msra.mxu0 %v467
    %526 = vmatpush.msra.mxu0 %v465
    %527 = vmatpush.msra.mxu0 %v463
    %528 = vmatpush.msra.mxu0 %v461
    %529 = vmatpush.msra.mxu0 %v459
    %530 = vmatpush.msra.mxu0 %v457
    %531 = vmatmul.f32.gmra.mxu0 %v424
    %v532 = vpop.f32.mrf.mxu0
    %v533 = vadd.f32 %v513, %v532
    %534 = vdwg.mxu0
    %535 = vmatpush.msra.mxu0 %v456
    %536 = vmatpush.msra.mxu0 %v454
    %537 = vmatpush.msra.mxu0 %v452
    %538 = vmatpush.msra.mxu0 %v450
    %539 = vmatpush.msra.mxu0 %v448
    %540 = vmatpush.msra.mxu0 %v446
    %541 = vmatpush.msra.mxu0 %v444
    %542 = vmatpush.msra.mxu0 %v442
    %543 = vmatpush.msra.mxu0 %v440
    %544 = vmatpush.msra.mxu0 %v438
    %545 = vmatpush.msra.mxu0 %v436
    %546 = vmatpush.msra.mxu0 %v434
    %547 = vmatpush.msra.mxu0 %v432
    %548 = vmatpush.msra.mxu0 %v430
    %549 = vmatpush.msra.mxu0 %v428
    %550 = vmatpush.msra.mxu0 %v426
    %551 = vmatmul.f32.gmra.mxu0 %v423
    %v552 = vpop.f32.mrf.mxu0
    %v553 = vadd.f32 %v492, %v552
    %554 = vdwg.mxu0
    %555 = vmatpush.msra.mxu0 %v488
    %556 = vmatpush.msra.mxu0 %v486
    %557 = vmatpush.msra.mxu0 %v484
    %558 = vmatpush.msra.mxu0 %v482
    %559 = vmatpush.msra.mxu0 %v480
    %560 = vmatpush.msra.mxu0 %v478
    %561 = vmatpush.msra.mxu0 %v476
    %562 = vmatpush.msra.mxu0 %v474
    %563 = vmatpush.msra.mxu0 %v472
    %564 = vmatpush.msra.mxu0 %v470
    %565 = vmatpush.msra.mxu0 %v468
    %566 = vmatpush.msra.mxu0 %v466
    %567 = vmatpush.msra.mxu0 %v464
    %568 = vmatpush.msra.mxu0 %v462
    %569 = vmatpush.msra.mxu0 %v460
    %570 = vmatpush.msra.mxu0 %v458
    %571 = vmatmul.f32.gmra.mxu0 %v424
    %v572 = vpop.f32.mrf.mxu0
    %v573 = vadd.f32 %v553, %v572
    %574 = vdwg.mxu0
    %v575 = vmax.f32 %v533, 0.0
    %v576 = vmax.f32 %v573, 0.0
    %v577 = vld [vmem:[#allocation8] sm:$0xff]
    %v578 = vld [vmem:[#allocation8 + $0x8] sm:$0xff]
    %v579 = vld [vmem:[#allocation8 + $0x10] sm:$0xff]
    %v580 = vld [vmem:[#allocation8 + $0x18] sm:$0xff]
    %v581 = vld [vmem:[#allocation8 + $0x20] sm:$0xff]
    %v582 = vld [vmem:[#allocation8 + $0x28] sm:$0xff]
    %v583 = vld [vmem:[#allocation8 + $0x30] sm:$0xff]
    %v584 = vld [vmem:[#allocation8 + $0x38] sm:$0xff]
    %v585 = vld [vmem:[#allocation8 + $0x40] sm:$0xff]
    %v586 = vld [vmem:[#allocation8 + $0x48] sm:$0xff]
    %v587 = vld [vmem:[#allocation8 + $0x50] sm:$0xff]
    %v588 = vld [vmem:[#allocation8 + $0x58] sm:$0xff]
    %v589 = vld [vmem:[#allocation8 + $0x60] sm:$0xff]
    %v590 = vld [vmem:[#allocation8 + $0x68] sm:$0xff]
    %v591 = vld [vmem:[#allocation8 + $0x70] sm:$0xff]
    %v592 = vld [vmem:[#allocation8 + $0x78] sm:$0xff]
    %v593 = vld [vmem:[#allocation8 + $0x80] sm:$0xff]
    %v594 = vld [vmem:[#allocation8 + $0x88] sm:$0xff]
    %v595 = vld [vmem:[#allocation8 + $0x90] sm:$0xff]
    %v596 = vld [vmem:[#allocation8 + $0x98] sm:$0xff]
    %v597 = vld [vmem:[#allocation8 + $0xa0] sm:$0xff]
    %v598 = vld [vmem:[#allocation8 + $0xa8] sm:$0xff]
    %v599 = vld [vmem:[#allocation8 + $0xb0] sm:$0xff]
    %v600 = vld [vmem:[#allocation8 + $0xb8] sm:$0xff]
    %v601 = vld [vmem:[#allocation8 + $0xc0] sm:$0xff]
    %v602 = vld [vmem:[#allocation8 + $0xc8] sm:$0xff]
    %v603 = vld [vmem:[#allocation8 + $0xd0] sm:$0xff]
    %v604 = vld [vmem:[#allocation8 + $0xd8] sm:$0xff]
    %v605 = vld [vmem:[#allocation8 + $0xe0] sm:$0xff]
    %v606 = vld [vmem:[#allocation8 + $0xe8] sm:$0xff]
    %v607 = vld [vmem:[#allocation8 + $0xf0] sm:$0xff]
    %v608 = vld [vmem:[#allocation8 + $0xf8] sm:$0xff]
    %v609 = vld [vmem:[%s8] sm:$0x1]
    %v611 = vperm.slane %v609, 0
    %613 = vmatpush.msra.mxu0 %v592
    %614 = vmatpush.msra.mxu0 %v591
    %615 = vmatpush.msra.mxu0 %v590
    %616 = vmatpush.msra.mxu0 %v589
    %617 = vmatpush.msra.mxu0 %v588
    %618 = vmatpush.msra.mxu0 %v587
    %619 = vmatpush.msra.mxu0 %v586
    %620 = vmatpush.msra.mxu0 %v585
    %621 = vmatpush.msra.mxu0 %v584
    %622 = vmatpush.msra.mxu0 %v583
    %623 = vmatpush.msra.mxu0 %v582
    %624 = vmatpush.msra.mxu0 %v581
    %625 = vmatpush.msra.mxu0 %v580
    %626 = vmatpush.msra.mxu0 %v579
    %627 = vmatpush.msra.mxu0 %v578
    %628 = vmatpush.msra.mxu0 %v577
    %629 = vmatmul.f32.gmra.mxu0 %v575
    %v630 = vpop.f32.mrf.mxu0
    %v631 = vadd.f32 %v611, %v630
    %632 = vdwg.mxu0
    %633 = vmatpush.msra.mxu0 %v608
    %634 = vmatpush.msra.mxu0 %v607
    %635 = vmatpush.msra.mxu0 %v606
    %636 = vmatpush.msra.mxu0 %v605
    %637 = vmatpush.msra.mxu0 %v604
    %638 = vmatpush.msra.mxu0 %v603
    %639 = vmatpush.msra.mxu0 %v602
    %640 = vmatpush.msra.mxu0 %v601
    %641 = vmatpush.msra.mxu0 %v600
    %642 = vmatpush.msra.mxu0 %v599
    %643 = vmatpush.msra.mxu0 %v598
    %644 = vmatpush.msra.mxu0 %v597
    %645 = vmatpush.msra.mxu0 %v596
    %646 = vmatpush.msra.mxu0 %v595
    %647 = vmatpush.msra.mxu0 %v594
    %648 = vmatpush.msra.mxu0 %v593
    %649 = vmatmul.f32.gmra.mxu0 %v576
    %v650 = vpop.f32.mrf.mxu0
    %v651 = vadd.f32 %v631, %v650
    %652 = vdwg.mxu0
    %v653 = vmax.f32 %v651, 0.0
    %v654 = vld [vmem:[#allocation10] sm:$0xff]
    %v655 = vld [vmem:[#allocation10 + $0x8] sm:$0xff]
    %v656 = vld [vmem:[#allocation10 + $0x10] sm:$0xff]
    %v657 = vld [vmem:[#allocation10 + $0x18] sm:$0xff]
    %v658 = vld [vmem:[#allocation10 + $0x20] sm:$0xff]
    %v659 = vld [vmem:[#allocation10 + $0x28] sm:$0xff]
    %v660 = vld [vmem:[#allocation10 + $0x30] sm:$0xff]
    %v661 = vld [vmem:[#allocation10 + $0x38] sm:$0xff]
    %v662 = vld [vmem:[#allocation10 + $0x40] sm:$0xff]
    %v663 = vld [vmem:[#allocation10 + $0x48] sm:$0xff]
    %v664 = vld [vmem:[#allocation10 + $0x50] sm:$0xff]
    %v665 = vld [vmem:[#allocation10 + $0x58] sm:$0xff]
    %v666 = vld [vmem:[#allocation10 + $0x60] sm:$0xff]
    %v667 = vld [vmem:[#allocation10 + $0x68] sm:$0xff]
    %v668 = vld [vmem:[#allocation10 + $0x70] sm:$0xff]
    %v669 = vld [vmem:[#allocation10 + $0x78] sm:$0xff]
    %670 = vmatpush.msra.mxu0 %v669
    %671 = vmatpush.msra.mxu0 %v668
    %672 = vmatpush.msra.mxu0 %v667
    %673 = vmatpush.msra.mxu0 %v666
    %674 = vmatpush.msra.mxu0 %v665
    %675 = vmatpush.msra.mxu0 %v664
    %676 = vmatpush.msra.mxu0 %v663
    %677 = vmatpush.msra.mxu0 %v662
    %678 = vmatpush.msra.mxu0 %v661
    %679 = vmatpush.msra.mxu0 %v660
    %680 = vmatpush.msra.mxu0 %v659
    %681 = vmatpush.msra.mxu0 %v658
    %682 = vmatpush.msra.mxu0 %v657
    %683 = vmatpush.msra.mxu0 %v656
    %684 = vmatpush.msra.mxu0 %v655
    %685 = vmatpush.msra.mxu0 %v654
    %686 = vmatmul.f32.gmra.mxu0 %v653
    %v687 = vpop.f32.mrf.mxu0
    %v688 = vadd.f32 0.0, %v687
    %689 = vdwg.mxu0
    %690 = vst [vmem:[#allocation11] sm:$0x3] %v688
    // Predicated region
    $region62: #{_lambda_.1} parent=1 // pred_check
      _
    $region63: #{_lambda_.1} parent=1 // pred_check_branch
      %692 = sbr.rel (0) target = $region65
    $region64: #{_lambda_.1} parent=1 // pred_region
      %694 = vsyncadd [#allocation4], 0
      %s696 = sshll.u32 [#allocation11], 4
      %s697 = int_to_ptr.vmem [resolvable:$true] %s696
      %s698 = sshll.u32 %s10, 4
      %s699 = int_to_ptr.hbm [resolvable:$true] %s698
      %701 = dma.vmem_to_hbm [thread:$0]  %s697, 32, %s699, [#allocation4]
    $region65: #{_lambda_.1} parent=1 // pred_fallthru
      _
    // Predicated region
    $region66: #{_lambda_.1} parent=1 // pred_check
      _
    $region67: #{_lambda_.1} parent=1 // pred_check_branch
      %703 = sbr.rel (0) target = $region69
    $region68: #{_lambda_.1} parent=1 // pred_region
      %705 = dma.done [#allocation4], 32
    $region69: #{_lambda_.1} parent=1 // pred_fallthru
      _
    %706 = vsyncpa [#allocation3], 1
    %707 = vsyncpa [#allocation6], 1
    %708 = vsyncpa [#allocation9], 1
    %709 = vsyncpa [#allocation4], 1

</llo_original>
